<compile_context>
chip_gen: v7x
topology: tpu7x:2x2x1
jax: 0.10.0
libtpu: 0.0.40
codegen_flags: <defaults>
</compile_context>

<pallas_src>
import jax
import jax.numpy as jnp
from jax import lax
from jax.experimental import pallas as pl
from jax.experimental.pallas import tpu as pltpu

BN_EPS = 1e-5


# ----------------------------------------------------------------------------
# Pass 1: conv-as-matmul (MXU, bf16 in / f32 acc) + per-channel lane-partial
#         sum & sum-of-squares accumulators.
# ----------------------------------------------------------------------------
def _conv_stats_kernel(p_ref, w_ref, y_ref, sum_ref, ssq_ref):
    # p_ref:   [1, K, tile_w]   bf16  (im2col columns for image n, tile t)
    # w_ref:   [Cout, K]        bf16  (resident; constant index map)
    # y_ref:   [1, Cout, tile_w] bf16 (raw conv output tile, lane-dense)
    # sum_ref/ssq_ref: [1, Cout, 128] f32 lane-partial accumulators per image
    @pl.when(pl.program_id(1) == 0)
    def _():
        sum_ref[...] = jnp.zeros_like(sum_ref)
        ssq_ref[...] = jnp.zeros_like(ssq_ref)

    y = jnp.dot(w_ref[...], p_ref[0], preferred_element_type=jnp.float32)
    y_ref[0] = y.astype(y_ref.dtype)

    cout, tile_w = y.shape
    s_acc = jnp.zeros((cout, 128), jnp.float32)
    q_acc = jnp.zeros((cout, 128), jnp.float32)
    for j in range(tile_w // 128):          # static unroll: vreg-aligned slices, VPU adds
        blk = y[:, j * 128:(j + 1) * 128]
        s_acc = s_acc + blk
        q_acc = q_acc + blk * blk
    sum_ref[0] += s_acc
    ssq_ref[0] += q_acc


# ----------------------------------------------------------------------------
# Pass 2: BN apply -- one fused multiply-add per element, NCHW-compatible out
# ----------------------------------------------------------------------------
def _bn_apply_kernel(y_ref, scale_ref, shift_ref, o_ref):
    y = y_ref[0].astype(jnp.float32)
    o_ref[0] = y * scale_ref[...] + shift_ref[...]


# ----------------------------------------------------------------------------
# Tiling helpers (generation-aware VMEM budget)
# ----------------------------------------------------------------------------
def _vmem_budget_bytes():
    try:
        cap = int(pltpu.get_tpu_info().vmem_capacity_bytes)
    except Exception:
        cap = 64 * 1024 * 1024
    # half of physical VMEM: ~64 MiB on v5e/v6e (128 MiB), ~32 MiB on v7x (64 MiB)
    return max(24 * 1024 * 1024, min(cap // 2, 100 * 1024 * 1024))


def _pick_tile_w(ohw_p, k, cout, budget):
    fixed = 2 * cout * k * 2 + 4 * cout * 128 * 4 + (2 << 20)   # weights + stats + slack
    per_col = 2 * (k * 2 + cout * 2)                            # dbl-buffered bf16 in/out
    cap_cols = max(128, (budget - fixed) // per_col)
    t = min(4096, cap_cols, ohw_p)
    t = max(128, (t // 128) * 128)
    while ohw_p % t:
        t -= 128
    return t


# ----------------------------------------------------------------------------
# Wrapper: NCHW -> bf16 tap-concat -> pallas passes -> NCHW
# ----------------------------------------------------------------------------
@jax.jit
def encoder_single_block_1(x, conv_w, conv_b, bn_gamma, bn_beta):
    # x:       [N, Cin, H, W]     (NCHW, like PyTorch)
    # conv_w:  [Cout, Cin, 4, 4]  (OIHW, like PyTorch)
    # conv_b:  [Cout]  -- mathematically cancelled by BN mean subtraction
    del conv_b
    N, Cin, H, W = x.shape
    Cout, _, KH, KW = conv_w.shape
    stride = 2
    OH = (H + 2 - KH) // stride + 1
    OW = (W + 2 - KW) // stride + 1
    OHW = OH * OW
    OHW_p = ((OHW + 127) // 128) * 128        # per-image lane padding (zeros)
    K = Cin * KH * KW
    M_true = N * OHW                           # true per-channel element count

    budget = _vmem_budget_bytes()
    tile_w = _pick_tile_w(OHW_p, K, Cout, budget)
    T = OHW_p // tile_w

    # ---- glue: bf16 pad + 16 strided-slice taps concatenated on channel axis ----
    xb = x.astype(jnp.bfloat16)
    xp = jnp.pad(xb, ((0, 0), (0, 0), (1, 1), (1, 1)))
    cols = []
    for kh in range(KH):
        for kw in range(KW):
            tap = lax.slice(
                xp,
                (0, 0, kh, kw),
                (N, Cin, kh + stride * (OH - 1) + 1, kw + stride * (OW - 1) + 1),
                (1, 1, stride, stride))                    # [N, Cin, OH, OW] bf16
            cols.append(tap.reshape(N, Cin, OHW))
    p = jnp.concatenate(cols, axis=1)                      # [N, K, OHW]; k=(kh*KW+kw)*Cin+ci
    if OHW_p != OHW:
        # zero columns give y == 0 exactly (no bias) -> no effect on sum / sum-sq
        p = jnp.pad(p, ((0, 0), (0, 0), (0, OHW_p - OHW)))

    # weights permuted to the (kh, kw, ci) K-order used above
    w2 = jnp.transpose(conv_w, (0, 2, 3, 1)).reshape(Cout, K).astype(jnp.bfloat16)

    # ---- pass 1: conv + per-channel lane-partial sum / sum-of-squares ----
    y_bf16, s_part, q_part = pl.pallas_call(
        _conv_stats_kernel,
        grid=(N, T),
        in_specs=[
            pl.BlockSpec((1, K, tile_w), lambda n, t: (n, 0, t)),
            pl.BlockSpec((Cout, K), lambda n, t: (0, 0)),
        ],
        out_specs=(
            pl.BlockSpec((1, Cout, tile_w), lambda n, t: (n, 0, t)),
            pl.BlockSpec((1, Cout, 128), lambda n, t: (n, 0, 0)),
            pl.BlockSpec((1, Cout, 128), lambda n, t: (n, 0, 0)),
        ),
        out_shape=(
            jax.ShapeDtypeStruct((N, Cout, OHW_p), jnp.bfloat16),
            jax.ShapeDtypeStruct((N, Cout, 128), jnp.float32),
            jax.ShapeDtypeStruct((N, Cout, 128), jnp.float32),
        ),
        compiler_params=pltpu.CompilerParams(
            dimension_semantics=("parallel", "arbitrary"),
            vmem_limit_bytes=int(budget)),
    )(p, w2)

    # ---- tiny per-channel folding (O(Cout) work, done once) ----
    s1 = jnp.sum(s_part, axis=(0, 2))                      # [Cout]
    s2 = jnp.sum(q_part, axis=(0, 2))
    inv_m = 1.0 / float(M_true)
    mean = s1 * inv_m
    var = jnp.maximum(s2 * inv_m - mean * mean, 0.0)       # biased var (torch training BN)
    scale = bn_gamma.astype(jnp.float32) * lax.rsqrt(var + BN_EPS)
    shift = bn_beta.astype(jnp.float32) - mean * scale
    scale2 = scale.reshape(Cout, 1)
    shift2 = shift.reshape(Cout, 1)

    # ---- pass 2: normalize; writes [N, Cout, OHW_p] directly (no transpose) ----
    out_p = pl.pallas_call(
        _bn_apply_kernel,
        grid=(N, T),
        in_specs=[
            pl.BlockSpec((1, Cout, tile_w), lambda n, t: (n, 0, t)),
            pl.BlockSpec((Cout, 1), lambda n, t: (0, 0)),
            pl.BlockSpec((Cout, 1), lambda n, t: (0, 0)),
        ],
        out_specs=pl.BlockSpec((1, Cout, tile_w), lambda n, t: (n, 0, t)),
        out_shape=jax.ShapeDtypeStruct((N, Cout, OHW_p), jnp.float32),
        compiler_params=pltpu.CompilerParams(
            dimension_semantics=("parallel", "parallel"),
            vmem_limit_bytes=int(budget)),
    )(y_bf16, scale2, shift2)

    # free reshape when OHW is already a multiple of 128; cheap slice otherwise
    out = out_p[:, :, :OHW].reshape(N, Cout, OH, OW)
    return out


# ----------------------------------------------------------------------------
# Pure-JAX references (for correctness check only)
# ----------------------------------------------------------------------------
def _reference_f32(x, conv_w, conv_b, bn_gamma, bn_beta):
    y = lax.conv_general_dilated(
        x, conv_w, window_strides=(2, 2), padding=((1, 1), (1, 1)),
        dimension_numbers=("NCHW", "OIHW", "NCHW"),
        preferred_element_type=jnp.float32)
    y = y + conv_b[None, :, None, None]
    mean = jnp.mean(y, axis=(0, 2, 3), keepdims=True)
    var = jnp.mean((y - mean) ** 2, axis=(0, 2, 3), keepdims=True)
    y = (y - mean) * lax.rsqrt(var + BN_EPS)
    return y * bn_gamma[None, :, None, None] + bn_beta[None, :, None, None]


def _reference_emul(x, conv_w, bn_gamma, bn_beta):
    # Emulates the kernel algorithm: bf16 conv operands / f32 accumulation,
    # no bias (cancelled by BN), single-pass variance, bf16-stored activations.
    y = lax.conv_general_dilated(
        x.astype(jnp.bfloat16), conv_w.astype(jnp.bfloat16),
        window_strides=(2, 2), padding=((1, 1), (1, 1)),
        dimension_numbers=("NCHW", "OIHW", "NCHW"),
        preferred_element_type=jnp.float32)
    mean = jnp.mean(y, axis=(0, 2, 3), keepdims=True)
    var = jnp.maximum(jnp.mean(y * y, axis=(0, 2, 3), keepdims=True) - mean * mean, 0.0)
    scale = bn_gamma[None, :, None, None] * lax.rsqrt(var + BN_EPS)
    shift = bn_beta[None, :, None, None] - mean * scale
    y_q = y.astype(jnp.bfloat16).astype(jnp.float32)
    return y_q * scale + shift


if __name__ == "__main__":
    key = jax.random.PRNGKey(0)
    k_x, k_w, k_b = jax.random.split(key, 3)

    N, Cin, H, W = 2, 4, 16, 16
    Cout = Cin * 2
    x = jax.random.normal(k_x, (N, Cin, H, W), dtype=jnp.float32)

    fan_in = Cin * 4 * 4
    bound = 1.0 / (fan_in ** 0.5)
    conv_w = jax.random.uniform(k_w, (Cout, Cin, 4, 4), jnp.float32, -bound, bound)
    conv_b = jax.random.uniform(k_b, (Cout,), jnp.float32, -bound, bound)
    bn_gamma = jnp.ones((Cout,), jnp.float32)   # PyTorch BatchNorm2d default weight
    bn_beta = jnp.zeros((Cout,), jnp.float32)   # PyTorch BatchNorm2d default bias

    out = jax.block_until_ready(
        encoder_single_block_1(x, conv_w, conv_b, bn_gamma, bn_beta))
    assert out.shape == (N, Cout, H // 2, W // 2), out.shape

    # Check 1: against a reference that emulates the kernel's numerics
    # (bf16 MXU operands, bf16-stored activations, dropped bias).
    ref_emul = jax.block_until_ready(_reference_emul(x, conv_w, bn_gamma, bn_beta))
    err_emul = float(jnp.max(jnp.abs(out - ref_emul)))
    assert jnp.allclose(out, ref_emul, atol=5e-3, rtol=5e-3), err_emul

    # Check 2: against the full-f32 reference with the bias included
    # (loose tolerance for bf16 MXU operands + bf16 activation storage).
    ref_f32 = jax.block_until_ready(
        _reference_f32(x, conv_w, conv_b, bn_gamma, bn_beta))
    err_f32 = float(jnp.max(jnp.abs(out - ref_f32)))
    assert jnp.allclose(out, ref_f32, atol=5e-2, rtol=5e-2), err_f32

    print("KERNEL_OK")
</pallas_src>

<mosaic_0001>
module attributes {stable_mosaic.version = 11 : i64} {
  func.func @_conv_stats_kernel(%arg0: i32, %arg1: i32, %arg2: memref<1x64x128xbf16, #tpu.memory_space<vmem>>, %arg3: memref<8x64xbf16, #tpu.memory_space<vmem>>, %arg4: memref<1x8x128xbf16, #tpu.memory_space<vmem>>, %arg5: memref<1x8x128xf32, #tpu.memory_space<vmem>>, %arg6: memref<1x8x128xf32, #tpu.memory_space<vmem>>) attributes {dimension_semantics = [#tpu.dimension_semantics<parallel>, #tpu.dimension_semantics<arbitrary>], iteration_bounds = array<i64: 2, 1>, scalar_prefetch = 0 : i64, scratch_operands = 0 : i64, tpu.core_type = #tpu.core_type<tc>, window_params = [{transform_indices = @transform_0, window_bounds = array<i64: 1, 64, 128>}, {pipeline_mode = #tpu.pipeline_mode<synchronous>, transform_indices = @transform_1, window_bounds = array<i64: 8, 64>}, {transform_indices = @transform_2, window_bounds = array<i64: 1, 8, 128>}, {transform_indices = @transform_3, window_bounds = array<i64: 1, 8, 128>}, {transform_indices = @transform_4, window_bounds = array<i64: 1, 8, 128>}]} {
    %c0_i32 = arith.constant 0 : i32
    %0 = arith.cmpi eq, %arg1, %c0_i32 : i32
    %1 = arith.extui %0 : i1 to i32
    %c0_i32_0 = arith.constant 0 : i32
    %2 = arith.cmpi ne, %1, %c0_i32_0 : i32
    scf.if %2 {
      %cst_22 = arith.constant 0.000000e+00 : f32
      %28 = vector.broadcast %cst_22 : f32 to vector<1x8x128xf32>
      %c0_23 = arith.constant 0 : index
      %c0_24 = arith.constant 0 : index
      %c0_25 = arith.constant 0 : index
      %29 = vector.load %arg5[%c0_23, %c0_24, %c0_25] : memref<1x8x128xf32, #tpu.memory_space<vmem>>, vector<1x8x128xf32>
      tpu.vector_store %arg5[%c0_23, %c0_24, %c0_25], %28 {strides = array<i32>} : memref<1x8x128xf32, #tpu.memory_space<vmem>>, vector<1x8x128xf32>,
      %cst_26 = arith.constant 0.000000e+00 : f32
      %30 = vector.broadcast %cst_26 : f32 to vector<1x8x128xf32>
      %c0_27 = arith.constant 0 : index
      %c0_28 = arith.constant 0 : index
      %c0_29 = arith.constant 0 : index
      %31 = vector.load %arg6[%c0_27, %c0_28, %c0_29] : memref<1x8x128xf32, #tpu.memory_space<vmem>>, vector<1x8x128xf32>
      tpu.vector_store %arg6[%c0_27, %c0_28, %c0_29], %30 {strides = array<i32>} : memref<1x8x128xf32, #tpu.memory_space<vmem>>, vector<1x8x128xf32>,
    } else {
    }
    %c0 = arith.constant 0 : index
    %c0_1 = arith.constant 0 : index
    %3 = vector.load %arg3[%c0, %c0_1] : memref<8x64xbf16, #tpu.memory_space<vmem>>, vector<8x64xbf16>
    %c0_2 = arith.constant 0 : index
    %c0_3 = arith.constant 0 : index
    %c0_4 = arith.constant 0 : index
    %4 = vector.load %arg2[%c0_2, %c0_3, %c0_4] : memref<1x64x128xbf16, #tpu.memory_space<vmem>>, vector<1x64x128xbf16>
    %5 = vector.shape_cast %4 : vector<1x64x128xbf16> to vector<64x128xbf16>
    %cst = arith.constant dense<0.000000e+00> : vector<8x128xf32>
    %6 = tpu.matmul %3, %5, %cst {dimension_numbers = #tpu.dot_dimension_numbers<[1], [0], [0], [1], [0, 0, 1, 1], [], []>} : vector<8x64xbf16>, vector<64x128xbf16>, vector<8x128xf32> -> vector<8x128xf32>
    %7 = arith.truncf %6 : vector<8x128xf32> to vector<8x128xbf16>
    %c0_5 = arith.constant 0 : index
    %c0_6 = arith.constant 0 : index
    %c0_7 = arith.constant 0 : index
    %8 = vector.load %arg4[%c0_5, %c0_6, %c0_7] : memref<1x8x128xbf16, #tpu.memory_space<vmem>>, vector<1x8x128xbf16>
    %9 = vector.shape_cast %8 : vector<1x8x128xbf16> to vector<8x128xbf16>
    %10 = vector.shape_cast %7 : vector<8x128xbf16> to vector<1x8x128xbf16>
    tpu.vector_store %arg4[%c0_5, %c0_6, %c0_7], %10 {strides = array<i32>} : memref<1x8x128xbf16, #tpu.memory_space<vmem>>, vector<1x8x128xbf16>,
    %cst_8 = arith.constant 0.000000e+00 : f32
    %11 = vector.broadcast %cst_8 : f32 to vector<8x128xf32>
    %cst_9 = arith.constant 0.000000e+00 : f32
    %12 = vector.broadcast %cst_9 : f32 to vector<8x128xf32>
    %13 = arith.addf %11, %6 : vector<8x128xf32>
    %14 = arith.mulf %6, %6 : vector<8x128xf32>
    %15 = arith.addf %12, %14 : vector<8x128xf32>
    %c0_10 = arith.constant 0 : index
    %c0_11 = arith.constant 0 : index
    %c0_12 = arith.constant 0 : index
    %16 = vector.load %arg5[%c0_10, %c0_11, %c0_12] : memref<1x8x128xf32, #tpu.memory_space<vmem>>, vector<1x8x128xf32>
    %17 = vector.shape_cast %16 : vector<1x8x128xf32> to vector<8x128xf32>
    %18 = arith.addf %17, %13 : vector<8x128xf32>
    %c0_13 = arith.constant 0 : index
    %c0_14 = arith.constant 0 : index
    %c0_15 = arith.constant 0 : index
    %19 = vector.load %arg5[%c0_13, %c0_14, %c0_15] : memref<1x8x128xf32, #tpu.memory_space<vmem>>, vector<1x8x128xf32>
    %20 = vector.shape_cast %19 : vector<1x8x128xf32> to vector<8x128xf32>
    %21 = vector.shape_cast %18 : vector<8x128xf32> to vector<1x8x128xf32>
    tpu.vector_store %arg5[%c0_13, %c0_14, %c0_15], %21 {strides = array<i32>} : memref<1x8x128xf32, #tpu.memory_space<vmem>>, vector<1x8x128xf32>,
    %c0_16 = arith.constant 0 : index
    %c0_17 = arith.constant 0 : index
    %c0_18 = arith.constant 0 : index
    %22 = vector.load %arg6[%c0_16, %c0_17, %c0_18] : memref<1x8x128xf32, #tpu.memory_space<vmem>>, vector<1x8x128xf32>
    %23 = vector.shape_cast %22 : vector<1x8x128xf32> to vector<8x128xf32>
    %24 = arith.addf %23, %15 : vector<8x128xf32>
    %c0_19 = arith.constant 0 : index
    %c0_20 = arith.constant 0 : index
    %c0_21 = arith.constant 0 : index
    %25 = vector.load %arg6[%c0_19, %c0_20, %c0_21] : memref<1x8x128xf32, #tpu.memory_space<vmem>>, vector<1x8x128xf32>
    %26 = vector.shape_cast %25 : vector<1x8x128xf32> to vector<8x128xf32>
    %27 = vector.shape_cast %24 : vector<8x128xf32> to vector<1x8x128xf32>
    tpu.vector_store %arg6[%c0_19, %c0_20, %c0_21], %27 {strides = array<i32>} : memref<1x8x128xf32, #tpu.memory_space<vmem>>, vector<1x8x128xf32>,
    return
  }
  func.func @transform_0(%arg0: i32, %arg1: i32) -> (i32, i32, i32) {
    %c0_i32 = arith.constant 0 : i32
    %c0_i32_0 = arith.constant 0 : i32
    return %arg0, %c0_i32, %arg1 : i32, i32, i32
  }
  func.func @transform_1(%arg0: i32, %arg1: i32) -> (i32, i32) {
    %c0_i32 = arith.constant 0 : i32
    %c0_i32_0 = arith.constant 0 : i32
    %c0_i32_1 = arith.constant 0 : i32
    return %c0_i32, %c0_i32_0 : i32, i32
  }
  func.func @transform_2(%arg0: i32, %arg1: i32) -> (i32, i32, i32) {
    %c0_i32 = arith.constant 0 : i32
    %c0_i32_0 = arith.constant 0 : i32
    return %arg0, %c0_i32, %arg1 : i32, i32, i32
  }
  func.func @transform_3(%arg0: i32, %arg1: i32) -> (i32, i32, i32) {
    %c0_i32 = arith.constant 0 : i32
    %c0_i32_0 = arith.constant 0 : i32
    %c0_i32_1 = arith.constant 0 : i32
    return %arg0, %c0_i32, %c0_i32_0 : i32, i32, i32
  }
  func.func @transform_4(%arg0: i32, %arg1: i32) -> (i32, i32, i32) {
    %c0_i32 = arith.constant 0 : i32
    %c0_i32_0 = arith.constant 0 : i32
    %c0_i32_1 = arith.constant 0 : i32
    return %arg0, %c0_i32, %c0_i32_0 : i32, i32, i32
  }
}

module attributes {stable_mosaic.version = 11 : i64} {
  func.func @_bn_apply_kernel(%arg0: i32, %arg1: i32, %arg2: memref<1x8x128xbf16, #tpu.memory_space<vmem>>, %arg3: memref<8x1xf32, #tpu.memory_space<vmem>>, %arg4: memref<8x1xf32, #tpu.memory_space<vmem>>, %arg5: memref<1x8x128xf32, #tpu.memory_space<vmem>>) attributes {dimension_semantics = [#tpu.dimension_semantics<parallel>, #tpu.dimension_semantics<parallel>], iteration_bounds = array<i64: 2, 1>, scalar_prefetch = 0 : i64, scratch_operands = 0 : i64, tpu.core_type = #tpu.core_type<tc>, window_params = [{transform_indices = @transform_0, window_bounds = array<i64: 1, 8, 128>}, {pipeline_mode = #tpu.pipeline_mode<synchronous>, transform_indices = @transform_1, window_bounds = array<i64: 8, 1>}, {pipeline_mode = #tpu.pipeline_mode<synchronous>, transform_indices = @transform_2, window_bounds = array<i64: 8, 1>}, {transform_indices = @transform_3, window_bounds = array<i64: 1, 8, 128>}]} {
    %c0 = arith.constant 0 : index
    %c0_0 = arith.constant 0 : index
    %c0_1 = arith.constant 0 : index
    %0 = vector.load %arg2[%c0, %c0_0, %c0_1] : memref<1x8x128xbf16, #tpu.memory_space<vmem>>, vector<1x8x128xbf16>
    %1 = vector.shape_cast %0 : vector<1x8x128xbf16> to vector<8x128xbf16>
    %2 = arith.extf %1 : vector<8x128xbf16> to vector<8x128xf32>
    %c0_2 = arith.constant 0 : index
    %c0_3 = arith.constant 0 : index
    %3 = vector.load %arg3[%c0_2, %c0_3] : memref<8x1xf32, #tpu.memory_space<vmem>>, vector<8x1xf32>
    %4 = vector.broadcast %3 : vector<8x1xf32> to vector<8x128xf32>
    %5 = arith.mulf %2, %4 : vector<8x128xf32>
    %c0_4 = arith.constant 0 : index
    %c0_5 = arith.constant 0 : index
    %6 = vector.load %arg4[%c0_4, %c0_5] : memref<8x1xf32, #tpu.memory_space<vmem>>, vector<8x1xf32>
    %7 = vector.broadcast %6 : vector<8x1xf32> to vector<8x128xf32>
    %8 = arith.addf %5, %7 : vector<8x128xf32>
    %c0_6 = arith.constant 0 : index
    %c0_7 = arith.constant 0 : index
    %c0_8 = arith.constant 0 : index
    %9 = vector.load %arg5[%c0_6, %c0_7, %c0_8] : memref<1x8x128xf32, #tpu.memory_space<vmem>>, vector<1x8x128xf32>
    %10 = vector.shape_cast %9 : vector<1x8x128xf32> to vector<8x128xf32>
    %11 = vector.shape_cast %8 : vector<8x128xf32> to vector<1x8x128xf32>
    tpu.vector_store %arg5[%c0_6, %c0_7, %c0_8], %11 {strides = array<i32>} : memref<1x8x128xf32, #tpu.memory_space<vmem>>, vector<1x8x128xf32>,
    return
  }
  func.func @transform_0(%arg0: i32, %arg1: i32) -> (i32, i32, i32) {
    %c0_i32 = arith.constant 0 : i32
    %c0_i32_0 = arith.constant 0 : i32
    return %arg0, %c0_i32, %arg1 : i32, i32, i32
  }
  func.func @transform_1(%arg0: i32, %arg1: i32) -> (i32, i32) {
    %c0_i32 = arith.constant 0 : i32
    %c0_i32_0 = arith.constant 0 : i32
    %c0_i32_1 = arith.constant 0 : i32
    return %c0_i32, %c0_i32_0 : i32, i32
  }
  func.func @transform_2(%arg0: i32, %arg1: i32) -> (i32, i32) {
    %c0_i32 = arith.constant 0 : i32
    %c0_i32_0 = arith.constant 0 : i32
    %c0_i32_1 = arith.constant 0 : i32
    return %c0_i32, %c0_i32_0 : i32, i32
  }
  func.func @transform_3(%arg0: i32, %arg1: i32) -> (i32, i32, i32) {
    %c0_i32 = arith.constant 0 : i32
    %c0_i32_0 = arith.constant 0 : i32
    return %arg0, %c0_i32, %arg1 : i32, i32, i32
  }
}

</mosaic_0001>

<llo_original>
// kernel: encoder_single_block_1.3
$region0: #{encoder_single_block_1.3}
  #allocation0 [shape = 'u32[]', space=smem, size = 0x4, offset = 0x4, fixed_abs, tag = 'smem constant byte address 0x4 - core index']
  #allocation1 [shape = 'u32[144,128]{1,0:T(1,128)}', space=vmem, size = 0x12000, scoped, tag = 'internal scratch']
  %s0 = inlined_call_operand.vmem [shape: bf16[2,8,128], index: 0, kind: input, shape index: {}]
  %s1 = inlined_call_operand.vmem [shape: f32[8,1], index: 1, kind: input, shape index: {}]
  %s2 = inlined_call_operand.vmem [shape: f32[8,1], index: 2, kind: input, shape index: {}]
  %s3 = inlined_call_operand.vmem [shape: f32[2,8,128], index: 3, kind: output, shape index: {}]
  %s4 = sld [smem:[#allocation0]]
  $region45: #{encoder_single_block_1.3} parent=0
    _
  %s6 = ssub.s32 1, %s4
  %s7 = scalar_select 0, %s6, %s4
  loop: start=0, step=1, limit=4
  $region2: #{encoder_single_block_1.3} parent=0 // loop_pre_header
    _
  $region3: #{encoder_single_block_1.3} parent=0 // loop_header
    %s9 = sphi 0, %s13
    %p10 = scmp.ge.s32.totalorder %s9, 4
    %s16 = sphi 0, %s28
    %s17 = sphi 0, %s24
    %s18 = sphi 0, %s16
    %s19 = sphi 0, %s17
    %s20 = sphi 0, %s18
    %s21 = sphi 0, %s19
    %s33 = sphi 0, %s35
    %s36 = sphi 0, %s33
    %s37 = sphi 0, %s36
    %s53 = sphi 0, %s37
    %s57 = sphi 0, %s57
    %s59 = sphi 0, %s57
    %s60 = sphi 0, %s59
    %s74 = sphi 0, %s60
    %s78 = sphi 0, %s78
    %s80 = sphi 0, %s78
    %s81 = sphi 0, %s80
    %s95 = sphi 0, %s81
    %s103 = sphi 0, %s105
    %s106 = sphi 0, %s103
    %s107 = sphi 0, %s106
    %s123 = sphi 0, %s107
  $region4: #{encoder_single_block_1.3} parent=0 // loop_header_branch
    %12 = sbr.rel (%p10) target = $region8
  $region5: #{encoder_single_block_1.3} parent=0 // loop_body
    %s14 = ssub.s32 %s9, 1
    %s15 = ssub.s32 %s9, 2
    %s22 = sadd.s32 1, %s17
    %p23 = scmp.ge.s32.totalorder %s22, 1
    %s24 = scalar_select %p23, 0, %s22
    %s25 = sadd.s32 1, %s16
    %s26 = scalar_select %p23, %s25, %s16
    %p27 = scmp.ge.s32.totalorder %s26, 2
    %s28 = scalar_select %p27, 0, %s26
    %s29 = ssub.s32 %s16, %s28
    %s30 = ssub.s32 %s17, %s24
    %s31 = sor.u32 %s29, %s30
    %p32 = scmp.eq.s32.totalorder %s31, 0
    %s34 = sadd.s32 %s33, 1
    %s35 = scalar_select %p32, %s33, %s34
    %p38 = pneg %p32
    %p39 = scmp.eq.s32.totalorder %s9, 1
    %p40 = por %p38, %p39
    %p41 = scmp.ne.s32.totalorder %s33, %s36
    %p42 = scmp.eq.s32.totalorder %s9, 0
    %p43 = por %p41, %p42
    %p44 = scmp.ne.s32.totalorder %s33, %s36
    %p45 = scmp.eq.s32.totalorder %s14, 1
    %p46 = por %p44, %p45
    %p47 = scmp.ne.s32.totalorder %s36, %s37
    %p48 = scmp.eq.s32.totalorder %s14, 0
    %p49 = por %p47, %p48
    %p50 = scmp.ne.s32.totalorder %s36, %s37
    %p51 = scmp.eq.s32.totalorder %s15, 1
    %p52 = por %p50, %p51
    %p54 = scmp.ne.s32.totalorder %s37, %s53
    %p55 = scmp.eq.s32.totalorder %s15, 0
    %p56 = por %p54, %p55
    %s58 = sadd.s32 %s57, 1
    %p61 = scmp.eq.s32.totalorder %s9, 1
    %p62 = scmp.ne.s32.totalorder %s57, %s59
    %p63 = scmp.eq.s32.totalorder %s9, 0
    %p64 = por %p62, %p63
    %p65 = scmp.ne.s32.totalorder %s57, %s59
    %p66 = scmp.eq.s32.totalorder %s14, 1
    %p67 = por %p65, %p66
    %p68 = scmp.ne.s32.totalorder %s59, %s60
    %p69 = scmp.eq.s32.totalorder %s14, 0
    %p70 = por %p68, %p69
    %p71 = scmp.ne.s32.totalorder %s59, %s60
    %p72 = scmp.eq.s32.totalorder %s15, 1
    %p73 = por %p71, %p72
    %p75 = scmp.ne.s32.totalorder %s60, %s74
    %p76 = scmp.eq.s32.totalorder %s15, 0
    %p77 = por %p75, %p76
    %s79 = sadd.s32 %s78, 1
    %p82 = scmp.eq.s32.totalorder %s9, 1
    %p83 = scmp.ne.s32.totalorder %s78, %s80
    %p84 = scmp.eq.s32.totalorder %s9, 0
    %p85 = por %p83, %p84
    %p86 = scmp.ne.s32.totalorder %s78, %s80
    %p87 = scmp.eq.s32.totalorder %s14, 1
    %p88 = por %p86, %p87
    %p89 = scmp.ne.s32.totalorder %s80, %s81
    %p90 = scmp.eq.s32.totalorder %s14, 0
    %p91 = por %p89, %p90
    %p92 = scmp.ne.s32.totalorder %s80, %s81
    %p93 = scmp.eq.s32.totalorder %s15, 1
    %p94 = por %p92, %p93
    %p96 = scmp.ne.s32.totalorder %s81, %s95
    %p97 = scmp.eq.s32.totalorder %s15, 0
    %p98 = por %p96, %p97
    %s99 = ssub.s32 %s16, %s28
    %s100 = ssub.s32 %s17, %s24
    %s101 = sor.u32 %s99, %s100
    %p102 = scmp.eq.s32.totalorder %s101, 0
    %s104 = sadd.s32 %s103, 1
    %s105 = scalar_select %p102, %s103, %s104
    %p108 = pneg %p102
    %p109 = scmp.eq.s32.totalorder %s9, 1
    %p110 = por %p108, %p109
    %p111 = scmp.ne.s32.totalorder %s103, %s106
    %p112 = scmp.eq.s32.totalorder %s9, 0
    %p113 = por %p111, %p112
    %p114 = scmp.ne.s32.totalorder %s103, %s106
    %p115 = scmp.eq.s32.totalorder %s14, 1
    %p116 = por %p114, %p115
    %p117 = scmp.ne.s32.totalorder %s106, %s107
    %p118 = scmp.eq.s32.totalorder %s14, 0
    %p119 = por %p117, %p118
    %p120 = scmp.ne.s32.totalorder %s106, %s107
    %p121 = scmp.eq.s32.totalorder %s15, 1
    %p122 = por %p120, %p121
    %p124 = scmp.ne.s32.totalorder %s107, %s123
    %p125 = scmp.eq.s32.totalorder %s15, 0
    %p126 = por %p124, %p125
    %p127 = scmp.le.s32.totalorder 1, %s9
    %p128 = scmp.lt.s32.totalorder %s9, 3
    %p129 = pnand %p127, %p128
    %p130 = pneg %p129
    // Predicated region
    $region9: #{encoder_single_block_1.3} parent=5 // pred_check
      _
    $region10: #{encoder_single_block_1.3} parent=5 // pred_check_branch
      %132 = sbr.rel (%p129) target = $region12
    $region11: #{encoder_single_block_1.3} parent=5 // pred_region
      %s133 = ssub.s32 %s9, 1
      // Predicated region
      $region13: #{encoder_single_block_1.3} parent=11 // pred_check
        %p134 = pneg %p70
      $region14: #{encoder_single_block_1.3} parent=11 // pred_check_branch
        %136 = sbr.rel (%p134) target = $region16
      $region15: #{encoder_single_block_1.3} parent=11 // pred_region
        _
      $region16: #{encoder_single_block_1.3} parent=11 // pred_fallthru
        _
      // Predicated region
      $region17: #{encoder_single_block_1.3} parent=11 // pred_check
        %p137 = pneg %p91
      $region18: #{encoder_single_block_1.3} parent=11 // pred_check_branch
        %139 = sbr.rel (%p137) target = $region20
      $region19: #{encoder_single_block_1.3} parent=11 // pred_region
        _
      $region20: #{encoder_single_block_1.3} parent=11 // pred_fallthru
        _
    $region12: #{encoder_single_block_1.3} parent=5 // pred_fallthru
      _
    %p140 = scmp.lt.s32.totalorder %s9, 2
    // Predicated region
    $region21: #{encoder_single_block_1.3} parent=5 // pred_check
      %p141 = pneg %p140
    $region22: #{encoder_single_block_1.3} parent=5 // pred_check_branch
      %143 = sbr.rel (%p141) target = $region24
    $region23: #{encoder_single_block_1.3} parent=5 // pred_region
      // Predicated region
      $region25: #{encoder_single_block_1.3} parent=23 // pred_check
        %p144 = pneg %p43
      $region26: #{encoder_single_block_1.3} parent=23 // pred_check_branch
        %146 = sbr.rel (%p144) target = $region28
      $region27: #{encoder_single_block_1.3} parent=23 // pred_region
        %p147 = scmp.lt.s32.totalorder %s16, 1
        %s148 = scalar_select %p147, %s16, 1
        %p149 = scmp.lt.s32.totalorder %s17, 0
        %s150 = scalar_select %p149, %s17, 0
        %s151 = sadd.s32 %s150, %s148
        %s152 = smul.addr %s151, 4
        %s153 = scalar_lea.vmem %s0, %s152
      $region28: #{encoder_single_block_1.3} parent=23 // pred_fallthru
        _
    $region24: #{encoder_single_block_1.3} parent=5 // pred_fallthru
      _
    %p154 = scmp.le.s32.totalorder 1, %s9
    %p155 = scmp.lt.s32.totalorder %s9, 3
    %p156 = pnand %p154, %p155
    %p157 = pneg %p156
    // Predicated region
    $region29: #{encoder_single_block_1.3} parent=5 // pred_check
      _
    $region30: #{encoder_single_block_1.3} parent=5 // pred_check_branch
      %159 = sbr.rel (%p156) target = $region32
    $region31: #{encoder_single_block_1.3} parent=5 // pred_region
      %s160 = ssub.s32 %s9, 1
      %p161 = scmp.lt.s32.totalorder %s18, 1
      %s162 = scalar_select %p161, %s18, 1
      %p163 = scmp.lt.s32.totalorder %s19, 0
      %s164 = scalar_select %p163, %s19, 0
      %s165 = sadd.s32 %s164, %s162
      %s166 = smul.addr %s165, 4
      %s167 = scalar_lea.vmem %s0, %s166
      %p168 = pneg %p49
      %p169 = pneg %p46
      %p170 = pneg %p70
      %p171 = pneg %p67
      %p172 = pneg %p91
      %p173 = pneg %p88
      %p174 = pneg %p119
      %p175 = pneg %p116
      %p176 = scmp.lt.s32.totalorder %s18, 1
      %s177 = scalar_select %p176, %s18, 1
      %p178 = scmp.lt.s32.totalorder %s19, 0
      %s179 = scalar_select %p178, %s19, 0
      %s180 = sadd.s32 %s179, %s177
      %s181 = smul.addr %s180, 8
      %s182 = scalar_lea.vmem %s3, %s181
      %p183 = scmp.lt.s32.totalorder %s18, 1
      %s184 = scalar_select %p183, %s18, 1
      %p185 = scmp.lt.s32.totalorder %s19, 0
      %s186 = scalar_select %p185, %s19, 0
      %s187 = sadd.s32 %s186, %s184
      %s188 = smul.addr %s187, 4
      %s189 = scalar_lea.vmem %s0, %s188
      %p190 = scmp.lt.s32.totalorder %s18, 1
      %s191 = scalar_select %p190, %s18, 1
      %p192 = scmp.lt.s32.totalorder %s19, 0
      %s193 = scalar_select %p192, %s19, 0
      %s194 = sadd.s32 %s193, %s191
      %s195 = smul.addr %s194, 8
      %s196 = scalar_lea.vmem %s3, %s195
      %v197 = vld [vmem:[%s189] sm:$0xf]
      %v198 = vunpack.c.l.bf16 %v197
      %v199 = vld [vmem:[%s1] sm:$0xff]
      %201 = vset.pattern.permute.xlu0 0
      %202 = vperm.xlu0 %201, %v199
      %v203 = vpop.permute.xlu0 %202
      %v205 = vmul.f32 %v198, %v203
      %v206 = vld [vmem:[%s2] sm:$0xff]
      %208 = vset.pattern.permute.xlu0 0
      %209 = vperm.xlu0 %208, %v206
      %v210 = vpop.permute.xlu0 %209
      %v212 = vadd.f32 %v205, %v210
      %213 = vst [vmem:[%s196] sm:$0xff] %v212
      %p214 = scmp.lt.s32.totalorder %s18, 1
      %s215 = scalar_select %p214, %s18, 1
      %p216 = scmp.lt.s32.totalorder %s19, 0
      %s217 = scalar_select %p216, %s19, 0
      %s218 = sadd.s32 %s217, %s215
      %s219 = smul.addr %s218, 8
      %s220 = scalar_lea.vmem %s3, %s219
      // Predicated region
      $region33: #{encoder_single_block_1.3} parent=31 // pred_check
        %p221 = pneg %p116
      $region34: #{encoder_single_block_1.3} parent=31 // pred_check_branch
        %223 = sbr.rel (%p221) target = $region36
      $region35: #{encoder_single_block_1.3} parent=31 // pred_region
        _
      $region36: #{encoder_single_block_1.3} parent=31 // pred_fallthru
        _
    $region32: #{encoder_single_block_1.3} parent=5 // pred_fallthru
      _
    %p224 = scmp.le.s32.totalorder 2, %s9
    // Predicated region
    $region37: #{encoder_single_block_1.3} parent=5 // pred_check
      %p225 = pneg %p224
    $region38: #{encoder_single_block_1.3} parent=5 // pred_check_branch
      %227 = sbr.rel (%p225) target = $region40
    $region39: #{encoder_single_block_1.3} parent=5 // pred_region
      %s228 = ssub.s32 %s9, 2
      // Predicated region
      $region41: #{encoder_single_block_1.3} parent=39 // pred_check
        %p229 = pneg %p122
      $region42: #{encoder_single_block_1.3} parent=39 // pred_check_branch
        %231 = sbr.rel (%p229) target = $region44
      $region43: #{encoder_single_block_1.3} parent=39 // pred_region
        %p232 = scmp.lt.s32.totalorder %s20, 1
        %s233 = scalar_select %p232, %s20, 1
        %p234 = scmp.lt.s32.totalorder %s21, 0
        %s235 = scalar_select %p234, %s21, 0
        %s236 = sadd.s32 %s235, %s233
        %s237 = smul.addr %s236, 8
        %s238 = scalar_lea.vmem %s3, %s237
      $region44: #{encoder_single_block_1.3} parent=39 // pred_fallthru
        _
    $region40: #{encoder_single_block_1.3} parent=5 // pred_fallthru
      _
  $region6: #{encoder_single_block_1.3} parent=0 // loop_footer
    %s13 = sadd.s32 1, %s9
  $region7: #{encoder_single_block_1.3} parent=0 // loop_footer_branch
    %8 = sbr.rel target = $region3
  $region8: #{encoder_single_block_1.3} parent=0 // loop_exit
    _

// kernel: encoder_single_block_1.2
$region0: #{encoder_single_block_1.2}
  #allocation0 [shape = 'u32[]', space=smem, size = 0x4, offset = 0x4, fixed_abs, tag = 'smem constant byte address 0x4 - core index']
  #allocation1 [shape = 'u32[144,128]{1,0:T(1,128)}', space=vmem, size = 0x12000, scoped, tag = 'internal scratch']
  %s0 = inlined_call_operand.vmem [shape: bf16[2,64,128], index: 0, kind: input, shape index: {}]
  %s1 = inlined_call_operand.vmem [shape: bf16[8,64], index: 1, kind: input, shape index: {}]
  %s2 = inlined_call_operand.vmem [shape: bf16[2,8,128], index: 2, kind: output, shape index: {0}]
  %s3 = inlined_call_operand.vmem [shape: f32[2,8,128], index: 3, kind: output, shape index: {1}]
  %s4 = inlined_call_operand.vmem [shape: f32[2,8,128], index: 4, kind: output, shape index: {2}]
  %5 = xla_tuple %s2, %s3, %s4
  %s6 = sld [smem:[#allocation0]]
  $region61: #{encoder_single_block_1.2} parent=0
    _
  %s8 = ssub.s32 1, %s6
  %s9 = scalar_select 0, %s8, %s6
  loop: start=0, step=1, limit=4
  $region2: #{encoder_single_block_1.2} parent=0 // loop_pre_header
    _
  $region3: #{encoder_single_block_1.2} parent=0 // loop_header
    %s11 = sphi 0, %s15
    %p12 = scmp.ge.s32.totalorder %s11, 4
    %s18 = sphi 0, %s30
    %s19 = sphi 0, %s26
    %s20 = sphi 0, %s18
    %s21 = sphi 0, %s19
    %s22 = sphi 0, %s20
    %s23 = sphi 0, %s21
    %s35 = sphi 0, %s37
    %s38 = sphi 0, %s35
    %s39 = sphi 0, %s38
    %s55 = sphi 0, %s39
    %s59 = sphi 0, %s59
    %s61 = sphi 0, %s59
    %s62 = sphi 0, %s61
    %s76 = sphi 0, %s62
    %s84 = sphi 0, %s86
    %s87 = sphi 0, %s84
    %s88 = sphi 0, %s87
    %s104 = sphi 0, %s88
    %s110 = sphi 0, %s112
    %s113 = sphi 0, %s110
    %s114 = sphi 0, %s113
    %s130 = sphi 0, %s114
    %s136 = sphi 0, %s138
    %s139 = sphi 0, %s136
    %s140 = sphi 0, %s139
    %s156 = sphi 0, %s140
  $region4: #{encoder_single_block_1.2} parent=0 // loop_header_branch
    %14 = sbr.rel (%p12) target = $region8
  $region5: #{encoder_single_block_1.2} parent=0 // loop_body
    %s16 = ssub.s32 %s11, 1
    %s17 = ssub.s32 %s11, 2
    %s24 = sadd.s32 1, %s19
    %p25 = scmp.ge.s32.totalorder %s24, 1
    %s26 = scalar_select %p25, 0, %s24
    %s27 = sadd.s32 1, %s18
    %s28 = scalar_select %p25, %s27, %s18
    %p29 = scmp.ge.s32.totalorder %s28, 2
    %s30 = scalar_select %p29, 0, %s28
    %s31 = ssub.s32 %s18, %s30
    %s32 = ssub.s32 %s19, %s26
    %s33 = sor.u32 %s31, %s32
    %p34 = scmp.eq.s32.totalorder %s33, 0
    %s36 = sadd.s32 %s35, 1
    %s37 = scalar_select %p34, %s35, %s36
    %p40 = pneg %p34
    %p41 = scmp.eq.s32.totalorder %s11, 1
    %p42 = por %p40, %p41
    %p43 = scmp.ne.s32.totalorder %s35, %s38
    %p44 = scmp.eq.s32.totalorder %s11, 0
    %p45 = por %p43, %p44
    %p46 = scmp.ne.s32.totalorder %s35, %s38
    %p47 = scmp.eq.s32.totalorder %s16, 1
    %p48 = por %p46, %p47
    %p49 = scmp.ne.s32.totalorder %s38, %s39
    %p50 = scmp.eq.s32.totalorder %s16, 0
    %p51 = por %p49, %p50
    %p52 = scmp.ne.s32.totalorder %s38, %s39
    %p53 = scmp.eq.s32.totalorder %s17, 1
    %p54 = por %p52, %p53
    %p56 = scmp.ne.s32.totalorder %s39, %s55
    %p57 = scmp.eq.s32.totalorder %s17, 0
    %p58 = por %p56, %p57
    %s60 = sadd.s32 %s59, 1
    %p63 = scmp.eq.s32.totalorder %s11, 1
    %p64 = scmp.ne.s32.totalorder %s59, %s61
    %p65 = scmp.eq.s32.totalorder %s11, 0
    %p66 = por %p64, %p65
    %p67 = scmp.ne.s32.totalorder %s59, %s61
    %p68 = scmp.eq.s32.totalorder %s16, 1
    %p69 = por %p67, %p68
    %p70 = scmp.ne.s32.totalorder %s61, %s62
    %p71 = scmp.eq.s32.totalorder %s16, 0
    %p72 = por %p70, %p71
    %p73 = scmp.ne.s32.totalorder %s61, %s62
    %p74 = scmp.eq.s32.totalorder %s17, 1
    %p75 = por %p73, %p74
    %p77 = scmp.ne.s32.totalorder %s62, %s76
    %p78 = scmp.eq.s32.totalorder %s17, 0
    %p79 = por %p77, %p78
    %s80 = ssub.s32 %s18, %s30
    %s81 = ssub.s32 %s19, %s26
    %s82 = sor.u32 %s80, %s81
    %p83 = scmp.eq.s32.totalorder %s82, 0
    %s85 = sadd.s32 %s84, 1
    %s86 = scalar_select %p83, %s84, %s85
    %p89 = pneg %p83
    %p90 = scmp.eq.s32.totalorder %s11, 1
    %p91 = por %p89, %p90
    %p92 = scmp.ne.s32.totalorder %s84, %s87
    %p93 = scmp.eq.s32.totalorder %s11, 0
    %p94 = por %p92, %p93
    %p95 = scmp.ne.s32.totalorder %s84, %s87
    %p96 = scmp.eq.s32.totalorder %s16, 1
    %p97 = por %p95, %p96
    %p98 = scmp.ne.s32.totalorder %s87, %s88
    %p99 = scmp.eq.s32.totalorder %s16, 0
    %p100 = por %p98, %p99
    %p101 = scmp.ne.s32.totalorder %s87, %s88
    %p102 = scmp.eq.s32.totalorder %s17, 1
    %p103 = por %p101, %p102
    %p105 = scmp.ne.s32.totalorder %s88, %s104
    %p106 = scmp.eq.s32.totalorder %s17, 0
    %p107 = por %p105, %p106
    %s108 = ssub.s32 %s18, %s30
    %p109 = scmp.eq.s32.totalorder %s108, 0
    %s111 = sadd.s32 %s110, 1
    %s112 = scalar_select %p109, %s110, %s111
    %p115 = pneg %p109
    %p116 = scmp.eq.s32.totalorder %s11, 1
    %p117 = por %p115, %p116
    %p118 = scmp.ne.s32.totalorder %s110, %s113
    %p119 = scmp.eq.s32.totalorder %s11, 0
    %p120 = por %p118, %p119
    %p121 = scmp.ne.s32.totalorder %s110, %s113
    %p122 = scmp.eq.s32.totalorder %s16, 1
    %p123 = por %p121, %p122
    %p124 = scmp.ne.s32.totalorder %s113, %s114
    %p125 = scmp.eq.s32.totalorder %s16, 0
    %p126 = por %p124, %p125
    %p127 = scmp.ne.s32.totalorder %s113, %s114
    %p128 = scmp.eq.s32.totalorder %s17, 1
    %p129 = por %p127, %p128
    %p131 = scmp.ne.s32.totalorder %s114, %s130
    %p132 = scmp.eq.s32.totalorder %s17, 0
    %p133 = por %p131, %p132
    %s134 = ssub.s32 %s18, %s30
    %p135 = scmp.eq.s32.totalorder %s134, 0
    %s137 = sadd.s32 %s136, 1
    %s138 = scalar_select %p135, %s136, %s137
    %p141 = pneg %p135
    %p142 = scmp.eq.s32.totalorder %s11, 1
    %p143 = por %p141, %p142
    %p144 = scmp.ne.s32.totalorder %s136, %s139
    %p145 = scmp.eq.s32.totalorder %s11, 0
    %p146 = por %p144, %p145
    %p147 = scmp.ne.s32.totalorder %s136, %s139
    %p148 = scmp.eq.s32.totalorder %s16, 1
    %p149 = por %p147, %p148
    %p150 = scmp.ne.s32.totalorder %s139, %s140
    %p151 = scmp.eq.s32.totalorder %s16, 0
    %p152 = por %p150, %p151
    %p153 = scmp.ne.s32.totalorder %s139, %s140
    %p154 = scmp.eq.s32.totalorder %s17, 1
    %p155 = por %p153, %p154
    %p157 = scmp.ne.s32.totalorder %s140, %s156
    %p158 = scmp.eq.s32.totalorder %s17, 0
    %p159 = por %p157, %p158
    %p160 = scmp.le.s32.totalorder 1, %s11
    %p161 = scmp.lt.s32.totalorder %s11, 3
    %p162 = pnand %p160, %p161
    %p163 = pneg %p162
    // Predicated region
    $region9: #{encoder_single_block_1.2} parent=5 // pred_check
      _
    $region10: #{encoder_single_block_1.2} parent=5 // pred_check_branch
      %165 = sbr.rel (%p162) target = $region12
    $region11: #{encoder_single_block_1.2} parent=5 // pred_region
      %s166 = ssub.s32 %s11, 1
      // Predicated region
      $region13: #{encoder_single_block_1.2} parent=11 // pred_check
        %p167 = pneg %p72
      $region14: #{encoder_single_block_1.2} parent=11 // pred_check_branch
        %169 = sbr.rel (%p167) target = $region16
      $region15: #{encoder_single_block_1.2} parent=11 // pred_region
        _
      $region16: #{encoder_single_block_1.2} parent=11 // pred_fallthru
        _
    $region12: #{encoder_single_block_1.2} parent=5 // pred_fallthru
      _
    %p170 = scmp.lt.s32.totalorder %s11, 2
    // Predicated region
    $region17: #{encoder_single_block_1.2} parent=5 // pred_check
      %p171 = pneg %p170
    $region18: #{encoder_single_block_1.2} parent=5 // pred_check_branch
      %173 = sbr.rel (%p171) target = $region20
    $region19: #{encoder_single_block_1.2} parent=5 // pred_region
      // Predicated region
      $region21: #{encoder_single_block_1.2} parent=19 // pred_check
        %p174 = pneg %p45
      $region22: #{encoder_single_block_1.2} parent=19 // pred_check_branch
        %176 = sbr.rel (%p174) target = $region24
      $region23: #{encoder_single_block_1.2} parent=19 // pred_region
        %p177 = scmp.lt.s32.totalorder %s18, 1
        %s178 = scalar_select %p177, %s18, 1
        %p179 = scmp.lt.s32.totalorder %s19, 0
        %s180 = scalar_select %p179, %s19, 0
        %s181 = smul.addr %s178, 8
        %s182 = sadd.s32 %s180, %s181
        %s183 = smul.addr %s182, 4
        %s184 = scalar_lea.vmem %s0, %s183
      $region24: #{encoder_single_block_1.2} parent=19 // pred_fallthru
        _
    $region20: #{encoder_single_block_1.2} parent=5 // pred_fallthru
      _
    %p185 = scmp.le.s32.totalorder 1, %s11
    %p186 = scmp.lt.s32.totalorder %s11, 3
    %p187 = pnand %p185, %p186
    %p188 = pneg %p187
    // Predicated region
    $region25: #{encoder_single_block_1.2} parent=5 // pred_check
      _
    $region26: #{encoder_single_block_1.2} parent=5 // pred_check_branch
      %190 = sbr.rel (%p187) target = $region28
    $region27: #{encoder_single_block_1.2} parent=5 // pred_region
      %s191 = ssub.s32 %s11, 1
      %p192 = scmp.lt.s32.totalorder %s20, 1
      %s193 = scalar_select %p192, %s20, 1
      %p194 = scmp.lt.s32.totalorder %s21, 0
      %s195 = scalar_select %p194, %s21, 0
      %s196 = smul.addr %s193, 8
      %s197 = sadd.s32 %s195, %s196
      %s198 = smul.addr %s197, 4
      %s199 = scalar_lea.vmem %s0, %s198
      %p200 = pneg %p51
      %p201 = pneg %p48
      %p202 = pneg %p72
      %p203 = pneg %p69
      %p204 = pneg %p100
      %p205 = pneg %p97
      %p206 = scmp.lt.s32.totalorder %s20, 1
      %s207 = scalar_select %p206, %s20, 1
      %p208 = scmp.lt.s32.totalorder %s21, 0
      %s209 = scalar_select %p208, %s21, 0
      %s210 = sadd.s32 %s209, %s207
      %s211 = smul.addr %s210, 4
      %s212 = scalar_lea.vmem %s2, %s211
      %p213 = pneg %p126
      %p214 = pneg %p123
      %p215 = scmp.lt.s32.totalorder %s20, 1
      %s216 = scalar_select %p215, %s20, 1
      %s217 = smul.addr %s216, 8
      %s218 = scalar_lea.vmem %s3, %s217
      %p219 = pneg %p152
      %p220 = pneg %p149
      %p221 = scmp.lt.s32.totalorder %s20, 1
      %s222 = scalar_select %p221, %s20, 1
      %s223 = smul.addr %s222, 8
      %s224 = scalar_lea.vmem %s4, %s223
      %p225 = scmp.lt.s32.totalorder %s20, 1
      %s226 = scalar_select %p225, %s20, 1
      %p227 = scmp.lt.s32.totalorder %s21, 0
      %s228 = scalar_select %p227, %s21, 0
      %s229 = smul.addr %s226, 8
      %s230 = sadd.s32 %s228, %s229
      %s231 = smul.addr %s230, 4
      %s232 = scalar_lea.vmem %s0, %s231
      %p233 = scmp.lt.s32.totalorder %s20, 1
      %s234 = scalar_select %p233, %s20, 1
      %p235 = scmp.lt.s32.totalorder %s21, 0
      %s236 = scalar_select %p235, %s21, 0
      %s237 = sadd.s32 %s236, %s234
      %s238 = smul.addr %s237, 4
      %s239 = scalar_lea.vmem %s2, %s238
      %p240 = scmp.lt.s32.totalorder %s20, 1
      %s241 = scalar_select %p240, %s20, 1
      %s242 = smul.addr %s241, 8
      %s243 = scalar_lea.vmem %s3, %s242
      %p244 = scmp.lt.s32.totalorder %s20, 1
      %s245 = scalar_select %p244, %s20, 1
      %s246 = smul.addr %s245, 8
      %s247 = scalar_lea.vmem %s4, %s246
      %p249 = scmp.eq.s32.totalorder %s21, 0
      // Predicated region
      $region29: #{encoder_single_block_1.2} parent=27 // pred_check
        %p250 = pneg %p249
      $region30: #{encoder_single_block_1.2} parent=27 // pred_check_branch
        %252 = sbr.rel (%p250) target = $region32
      $region31: #{encoder_single_block_1.2} parent=27 // pred_region
        %253 = vst [vmem:[%s243] sm:$0xff] 0.0
        %254 = vst [vmem:[%s247] sm:$0xff] 0.0
      $region32: #{encoder_single_block_1.2} parent=27 // pred_fallthru
        _
      %v255 = vld [vmem:[%s1] sm:$0xf]
      %v256 = vld [vmem:[%s232] sm:$0xf]
      %v257 = vld [vmem:[%s232 + $0x4] sm:$0xf]
      %v258 = vld [vmem:[%s232 + $0x8] sm:$0xf]
      %v259 = vld [vmem:[%s232 + $0xc] sm:$0xf]
      %v260 = vld [vmem:[%s232 + $0x10] sm:$0xf]
      %v261 = vld [vmem:[%s232 + $0x14] sm:$0xf]
      %v262 = vld [vmem:[%s232 + $0x18] sm:$0xf]
      %v263 = vld [vmem:[%s232 + $0x1c] sm:$0xf]
      %v272 = vunpack.c.l.b16 %v256
      %v273 = vunpack.c.l.b16 %v257
      %v274 = vunpack.c.l.b16 %v258
      %v275 = vunpack.c.l.b16 %v259
      %v276 = vunpack.c.l.b16 %v260
      %v277 = vunpack.c.l.b16 %v261
      %v278 = vunpack.c.l.b16 %v262
      %v279 = vunpack.c.l.b16 %v263
      %v280 = vpack.c.b16 %v273, %v272
      %v281 = vpack.c.b16 %v275, %v274
      %v282 = vpack.c.b16 %v277, %v276
      %v283 = vpack.c.b16 %v279, %v278
      %vm288 = vcmask 523264
      %v290 = vsel %vm288, %v255, 0
      %292 = vmatprep.subr.bf16.mxu0 0
      %293 = vmatpush1.bf16.msra.mxu0 %v280
      %294 = vmatprep.subr.bf16.mxu0 0
      %295 = vmatpush1.bf16.msra.mxu0 %v281
      %296 = vmatprep.subr.bf16.mxu0 0
      %297 = vmatpush1.bf16.msra.mxu0 %v282
      %298 = vmatprep.subr.bf16.mxu0 0
      %299 = vmatpush1.bf16.msra.mxu0 %v283
      %300 = vmatprep.subr.bf16.mxu0 0
      %301 = vmatpush1.bf16.msra.mxu0 0
      %302 = vmatprep.subr.bf16.mxu0 0
      %303 = vmatpush1.bf16.msra.mxu0 0
      %304 = vmatprep.subr.bf16.mxu0 0
      %305 = vmatpush1.bf16.msra.mxu0 0
      %306 = vmatprep.subr.bf16.mxu0 0
      %307 = vmatpush1.bf16.msra.mxu0 0
      %308 = vmatprep.subr.bf16.mxu0 0
      %309 = vmatpush1.bf16.msra.mxu0 0
      %310 = vmatprep.subr.bf16.mxu0 0
      %311 = vmatpush1.bf16.msra.mxu0 0
      %312 = vmatprep.subr.bf16.mxu0 0
      %313 = vmatpush1.bf16.msra.mxu0 0
      %314 = vmatprep.subr.bf16.mxu0 0
      %315 = vmatpush1.bf16.msra.mxu0 0
      %316 = vmatprep.subr.bf16.mxu0 0
      %317 = vmatpush1.bf16.msra.mxu0 0
      %318 = vmatprep.subr.bf16.mxu0 0
      %319 = vmatpush1.bf16.msra.mxu0 0
      %320 = vmatprep.subr.bf16.mxu0 0
      %321 = vmatpush1.bf16.msra.mxu0 0
      %322 = vmatprep.subr.bf16.mxu0 0
      %323 = vmatpush1.bf16.msra.mxu0 0
      %324 = vmatprep.mubr.bf16.mxu0 0
      %325 = vmatmul.mubr.bf16.gmra.mrb[0].mxu0 %v290
      %v326 = vpop.f32.mrb[0].mxu0
      %v327 = vadd.f32 0.0, %v326
      %v328 = vpop.f32.mrb[0].mxu0
      %v329 = vpop.f32.mrb[0].mxu0
      %v330 = vpop.f32.mrb[0].mxu0
      %331 = vdwg.mxu0
      %v332 = vpack.c.bf16 %v327, %v327
      %333 = vst [vmem:[%s239] sm:$0xf] %v332
      %v334 = vadd.f32 %v327, 0.0
      %v335 = vmul.f32 %v327, %v327
      %v336 = vadd.f32 %v335, 0.0
      %v337 = vld [vmem:[%s243] sm:$0xff]
      %v338 = vadd.f32 %v337, %v334
      %339 = vst [vmem:[%s243] sm:$0xff] %v338
      %v340 = vld [vmem:[%s247] sm:$0xff]
      %v341 = vadd.f32 %v340, %v336
      %342 = vst [vmem:[%s247] sm:$0xff] %v341
      %p343 = scmp.lt.s32.totalorder %s20, 1
      %s344 = scalar_select %p343, %s20, 1
      %p345 = scmp.lt.s32.totalorder %s21, 0
      %s346 = scalar_select %p345, %s21, 0
      %s347 = sadd.s32 %s346, %s344
      %s348 = smul.addr %s347, 4
      %s349 = scalar_lea.vmem %s2, %s348
      %p350 = scmp.lt.s32.totalorder %s20, 1
      %s351 = scalar_select %p350, %s20, 1
      %s352 = smul.addr %s351, 8
      %s353 = scalar_lea.vmem %s3, %s352
      %p354 = scmp.lt.s32.totalorder %s20, 1
      %s355 = scalar_select %p354, %s20, 1
      %s356 = smul.addr %s355, 8
      %s357 = scalar_lea.vmem %s4, %s356
      // Predicated region
      $region33: #{encoder_single_block_1.2} parent=27 // pred_check
        %p358 = pneg %p97
      $region34: #{encoder_single_block_1.2} parent=27 // pred_check_branch
        %360 = sbr.rel (%p358) target = $region36
      $region35: #{encoder_single_block_1.2} parent=27 // pred_region
        _
      $region36: #{encoder_single_block_1.2} parent=27 // pred_fallthru
        _
      // Predicated region
      $region37: #{encoder_single_block_1.2} parent=27 // pred_check
        %p361 = pneg %p123
      $region38: #{encoder_single_block_1.2} parent=27 // pred_check_branch
        %363 = sbr.rel (%p361) target = $region40
      $region39: #{encoder_single_block_1.2} parent=27 // pred_region
        _
      $region40: #{encoder_single_block_1.2} parent=27 // pred_fallthru
        _
      // Predicated region
      $region41: #{encoder_single_block_1.2} parent=27 // pred_check
        %p364 = pneg %p149
      $region42: #{encoder_single_block_1.2} parent=27 // pred_check_branch
        %366 = sbr.rel (%p364) target = $region44
      $region43: #{encoder_single_block_1.2} parent=27 // pred_region
        _
      $region44: #{encoder_single_block_1.2} parent=27 // pred_fallthru
        _
    $region28: #{encoder_single_block_1.2} parent=5 // pred_fallthru
      _
    %p367 = scmp.le.s32.totalorder 2, %s11
    // Predicated region
    $region45: #{encoder_single_block_1.2} parent=5 // pred_check
      %p368 = pneg %p367
    $region46: #{encoder_single_block_1.2} parent=5 // pred_check_branch
      %370 = sbr.rel (%p368) target = $region48
    $region47: #{encoder_single_block_1.2} parent=5 // pred_region
      %s371 = ssub.s32 %s11, 2
      // Predicated region
      $region49: #{encoder_single_block_1.2} parent=47 // pred_check
        %p372 = pneg %p103
      $region50: #{encoder_single_block_1.2} parent=47 // pred_check_branch
        %374 = sbr.rel (%p372) target = $region52
      $region51: #{encoder_single_block_1.2} parent=47 // pred_region
        %p375 = scmp.lt.s32.totalorder %s22, 1
        %s376 = scalar_select %p375, %s22, 1
        %p377 = scmp.lt.s32.totalorder %s23, 0
        %s378 = scalar_select %p377, %s23, 0
        %s379 = sadd.s32 %s378, %s376
        %s380 = smul.addr %s379, 4
        %s381 = scalar_lea.vmem %s2, %s380
      $region52: #{encoder_single_block_1.2} parent=47 // pred_fallthru
        _
      // Predicated region
      $region53: #{encoder_single_block_1.2} parent=47 // pred_check
        %p382 = pneg %p129
      $region54: #{encoder_single_block_1.2} parent=47 // pred_check_branch
        %384 = sbr.rel (%p382) target = $region56
      $region55: #{encoder_single_block_1.2} parent=47 // pred_region
        %p385 = scmp.lt.s32.totalorder %s22, 1
        %s386 = scalar_select %p385, %s22, 1
        %s387 = smul.addr %s386, 8
        %s388 = scalar_lea.vmem %s3, %s387
      $region56: #{encoder_single_block_1.2} parent=47 // pred_fallthru
        _
      // Predicated region
      $region57: #{encoder_single_block_1.2} parent=47 // pred_check
        %p389 = pneg %p155
      $region58: #{encoder_single_block_1.2} parent=47 // pred_check_branch
        %391 = sbr.rel (%p389) target = $region60
      $region59: #{encoder_single_block_1.2} parent=47 // pred_region
        %p392 = scmp.lt.s32.totalorder %s22, 1
        %s393 = scalar_select %p392, %s22, 1
        %s394 = smul.addr %s393, 8
        %s395 = scalar_lea.vmem %s4, %s394
      $region60: #{encoder_single_block_1.2} parent=47 // pred_fallthru
        _
    $region48: #{encoder_single_block_1.2} parent=5 // pred_fallthru
      _
  $region6: #{encoder_single_block_1.2} parent=0 // loop_footer
    %s15 = sadd.s32 1, %s11
  $region7: #{encoder_single_block_1.2} parent=0 // loop_footer_branch
    %10 = sbr.rel target = $region3
  $region8: #{encoder_single_block_1.2} parent=0 // loop_exit
    _

</llo_original>
